<compile_context>
chip_gen: v6e
topology: v6e:2x2x1
jax: 0.10.0
libtpu: 0.0.40
codegen_flags: <defaults>
</compile_context>

<pallas_src>
import functools

import jax
import jax.numpy as jnp
from jax import lax
from jax.experimental import pallas as pl
from jax.experimental.pallas import tpu as pltpu

_LANE = 128     # lane alignment for feature / answer dims
_BATCH = 16     # batch padded to 16 sublanes (bf16 packs 16 rows per vreg)
_TN_MAX = 512   # answer-dim tile width (>=256 fills the v6e/v7x MXU columns)


def _round_up(n, m):
    return -(-n // m) * m


def _padded_answers(num_answers):
    a128 = max(_LANE, _round_up(num_answers, _LANE))
    if a128 <= _TN_MAX:
        return a128
    return _round_up(num_answers, _TN_MAX)


# ----------------------------------------------------------------------------
# Fused kernel, grid over answer tiles:
#   step j == 0 : x = tanh(pooled @ W_enc + b_enc)                   -> write x
#                 h = BertLayerNorm(GeLU(x @ W1 + b1)) * gamma + beta -> VMEM
#   every step  : logit[:, tile_j] = h @ W2[:, tile_j] + b2[tile_j]
# ----------------------------------------------------------------------------
def gqa_fused_kernel(pooled_ref, wenc_ref, benc_ref, w1_ref, b1_ref,
                     gamma_ref, beta_ref, w2_ref, b2_ref,
                     logit_ref, x_ref, h_sc):
    @pl.when(pl.program_id(0) == 0)
    def _():
        # encoder stand-in: fused feat+pos projection of the pooled row
        x = jnp.tanh(
            jnp.dot(pooled_ref[...], wenc_ref[...],
                    preferred_element_type=jnp.float32) + benc_ref[...])
        x_ref[...] = x                                               # (B, H) f32

        # logit_fc prefix: Linear(H, 2H) -> GeLU(erf) -> BertLayerNorm(eps=1e-12)
        h = jnp.dot(x.astype(jnp.bfloat16), w1_ref[...],
                    preferred_element_type=jnp.float32) + b1_ref[...]
        h = h * 0.5 * (1.0 + lax.erf(h * 0.7071067811865476))        # exact GeLU
        u = jnp.mean(h, axis=-1, keepdims=True)                      # f32 stats
        s = jnp.mean((h - u) * (h - u), axis=-1, keepdims=True)
        h = (h - u) * lax.rsqrt(s + 1e-12)
        h_sc[...] = (h * gamma_ref[...] + beta_ref[...]).astype(h_sc.dtype)

    # final Linear(2H, A), tiled over the (padded) answer dimension
    logit_ref[...] = (
        jnp.dot(h_sc[...], w2_ref[...], preferred_element_type=jnp.float32)
        + b2_ref[...])


def _vmem_limit_bytes(b_pad, f_pad, h, tn):
    # single-buffered constant-index inputs
    const = (b_pad * f_pad * 2 + f_pad * h * 2 + h * 4
             + h * 2 * h * 2 + 3 * 2 * h * 4)
    # double-buffered streamed W2 / b2 tiles
    stream = 2 * (2 * h * tn * 2 + tn * 4)
    # double-buffered outputs + scratch
    outs = 2 * (b_pad * tn * 4 + b_pad * h * 4)
    scratch = b_pad * 2 * h * 2
    need = const + stream + outs + scratch
    # ~2x headroom for Mosaic-internal scratch; clamp to a value that is safe
    # on every TPU generation (v7x physical VMEM is 64 MiB per core).
    return int(min(max(2 * need, 16 << 20), 48 << 20))


def _gqa_fused_call(pooled, params, single_buffer_consts):
    """pooled: (B_pad, F_pad) bf16, batch/lane padded. Returns (logit_pad, x_pad)."""
    b_pad, f_pad = pooled.shape
    h = params["w_enc"].shape[1]
    a_pad = params["w2"].shape[1]
    tn = min(_TN_MAX, a_pad)
    grid = (a_pad // tn,)

    # Constant-index blocks are fetched once: single-buffer them to avoid
    # wasting VMEM on a second copy (biggest saver at real LXMERT sizes).
    const_mode = pl.Buffered(1) if single_buffer_consts else None

    def const_spec(shape):
        return pl.BlockSpec(shape, lambda j: (0,) * len(shape),
                            pipeline_mode=const_mode)

    in_specs = [
        const_spec((b_pad, f_pad)),                   # pooled [feat;pos] (bf16)
        const_spec((f_pad, h)),                       # W_enc (bf16)
        const_spec((1, h)),                           # b_enc
        const_spec((h, 2 * h)),                       # W1 (bf16)
        const_spec((1, 2 * h)),                       # b1
        const_spec((1, 2 * h)),                       # gamma
        const_spec((1, 2 * h)),                       # beta
        pl.BlockSpec((2 * h, tn), lambda j: (0, j)),  # W2 tile (bf16), streamed
        pl.BlockSpec((1, tn),     lambda j: (0, j)),  # b2 tile
    ]
    out_specs = [
        pl.BlockSpec((b_pad, tn), lambda j: (0, j)),  # logit tile (lane-dense)
        pl.BlockSpec((b_pad, h),  lambda j: (0, 0)),  # x (resident across axis)
    ]
    out_shape = [
        jax.ShapeDtypeStruct((b_pad, a_pad), jnp.float32),
        jax.ShapeDtypeStruct((b_pad, h), jnp.float32),
    ]

    return pl.pallas_call(
        gqa_fused_kernel,
        out_shape=out_shape,
        grid=grid,
        in_specs=in_specs,
        out_specs=out_specs,
        scratch_shapes=[pltpu.VMEM((b_pad, 2 * h), jnp.bfloat16)],
        compiler_params=pltpu.CompilerParams(
            # x / h_sc are produced at step 0 and reused on every answer tile,
            # so the single grid axis must stay "arbitrary" (single core).
            dimension_semantics=("arbitrary",),
            vmem_limit_bytes=_vmem_limit_bytes(b_pad, f_pad, h, tn)),
    )(pooled, params["w_enc"], params["b_enc"], params["w1"], params["b1"],
      params["gamma"], params["beta"], params["w2"], params["b2"])


# ----------------------------------------------------------------------------
# JIT-ed forward.  Returns (logit, x) exactly like GQAModel.forward.
# ----------------------------------------------------------------------------
def _forward_impl(feat, pos, params, *, num_answers, single_buffer_consts):
    b = feat.shape[0]
    f_pad = params["w_enc"].shape[0]
    # Encoder stand-in prologue (layout plumbing, tiny): mean-pool over objects
    # in f32 with an XLA reduce (no (B,O,F+4) HBM copy), fuse feat/pos into one
    # 128-aligned row, cast to bf16 so the kernel's input DMA is half-width.
    pooled = jnp.concatenate(
        [jnp.mean(feat, axis=1), jnp.mean(pos.astype(feat.dtype), axis=1)],
        axis=-1)                                                    # (B, F+4) f32
    b_pad = _round_up(b, _BATCH)
    pooled = jnp.pad(pooled, ((0, b_pad - b), (0, f_pad - pooled.shape[-1])))
    pooled = pooled.astype(jnp.bfloat16)                            # (B_pad, F_pad)

    logit_pad, x_pad = _gqa_fused_call(pooled, params, single_buffer_consts)
    return logit_pad[:b, :num_answers], x_pad[:b]


_forward_jit = jax.jit(
    _forward_impl, static_argnames=("num_answers", "single_buffer_consts"))


def gqa_model_forward(feat, pos, params, num_answers):
    try:
        return _forward_jit(feat, pos, params,
                            num_answers=num_answers, single_buffer_consts=True)
    except Exception:
        # pipeline_mode=pl.Buffered(1) not supported by this JAX/Mosaic build:
        # fall back to default double buffering of the constant inputs.
        return _forward_jit(feat, pos, params,
                            num_answers=num_answers, single_buffer_consts=False)


# ----------------------------------------------------------------------------
# Deterministic parameter init (BERT-style: normal(0, 0.02) weights, zero bias,
# LayerNorm gamma=1, beta=0).  Large weights stored in bf16 (f32 accumulation
# in-kernel); W_enc rows padded to a 128-lane multiple of F+4, W2/b2 pre-padded
# to the answer-tile multiple.
# ----------------------------------------------------------------------------
def make_params(key, feat_dim, hid_dim, num_answers):
    k = jax.random.split(key, 4)
    std = 0.02
    f_pad = _round_up(feat_dim + 4, _LANE)
    a_pad = _padded_answers(num_answers)

    wf = jax.random.normal(k[0], (feat_dim, hid_dim), jnp.float32) * std
    wp = jax.random.normal(k[1], (4, hid_dim), jnp.float32) * std
    w_enc = (jnp.zeros((f_pad, hid_dim), jnp.float32)
             .at[:feat_dim].set(wf)
             .at[feat_dim:feat_dim + 4].set(wp))                   # (F_pad, H)

    w2 = jax.random.normal(k[3], (2 * hid_dim, num_answers), jnp.float32) * std
    w2_pad = jnp.zeros((2 * hid_dim, a_pad), jnp.float32).at[:, :num_answers].set(w2)

    return {
        # encoder stand-in
        "w_enc": w_enc.astype(jnp.bfloat16),
        "b_enc": jnp.zeros((1, hid_dim), jnp.float32),
        # logit_fc
        "w1": (jax.random.normal(k[2], (hid_dim, 2 * hid_dim), jnp.float32)
               * std).astype(jnp.bfloat16),
        "b1": jnp.zeros((1, 2 * hid_dim), jnp.float32),
        "gamma": jnp.ones((1, 2 * hid_dim), jnp.float32),
        "beta": jnp.zeros((1, 2 * hid_dim), jnp.float32),
        "w2": w2_pad.astype(jnp.bfloat16),
        "b2": jnp.zeros((1, a_pad), jnp.float32),
    }


if __name__ == "__main__":
    B, O, F = 2, 8, 32          # batch, objects, visual feature size
    HID = 32                    # lxrt_encoder.dim (hidden size)
    NUM_ANSWERS = 16

    key = jax.random.PRNGKey(0)
    k_feat, k_pos, k_param = jax.random.split(key, 3)
    feat = jax.random.normal(k_feat, (B, O, F), jnp.float32)
    pos = jax.random.uniform(k_pos, (B, O, 4), jnp.float32)
    params = make_params(k_param, F, HID, NUM_ANSWERS)

    logit, x = gqa_model_forward(feat, pos, params, NUM_ANSWERS)
    jax.block_until_ready((logit, x))

    assert logit.shape == (B, NUM_ANSWERS), logit.shape
    assert x.shape == (B, HID), x.shape
    assert jnp.all(jnp.isfinite(logit)) and jnp.all(jnp.isfinite(x))
    print("KERNEL_OK")
</pallas_src>

<mosaic_0001>
module attributes {stable_mosaic.version = 11 : i64} {
  func.func @gqa_fused_kernel(%arg0: i32, %arg1: memref<16x128xbf16, #tpu.memory_space<vmem>>, %arg2: memref<128x32xbf16, #tpu.memory_space<vmem>>, %arg3: memref<1x32xf32, #tpu.memory_space<vmem>>, %arg4: memref<32x64xbf16, #tpu.memory_space<vmem>>, %arg5: memref<1x64xf32, #tpu.memory_space<vmem>>, %arg6: memref<1x64xf32, #tpu.memory_space<vmem>>, %arg7: memref<1x64xf32, #tpu.memory_space<vmem>>, %arg8: memref<64x128xbf16, #tpu.memory_space<vmem>>, %arg9: memref<1x128xf32, #tpu.memory_space<vmem>>, %arg10: memref<16x128xf32, #tpu.memory_space<vmem>>, %arg11: memref<16x32xf32, #tpu.memory_space<vmem>>, %arg12: memref<16x64xbf16, #tpu.memory_space<vmem>>) attributes {dimension_semantics = [#tpu.dimension_semantics<arbitrary>], iteration_bounds = array<i64: 1>, scalar_prefetch = 0 : i64, scratch_operands = 1 : i64, tpu.core_type = #tpu.core_type<tc>, window_params = [{pipeline_mode = #tpu.pipeline_mode<synchronous>, transform_indices = @transform_0, window_bounds = array<i64: 16, 128>}, {pipeline_mode = #tpu.pipeline_mode<synchronous>, transform_indices = @transform_1, window_bounds = array<i64: 128, 32>}, {pipeline_mode = #tpu.pipeline_mode<synchronous>, transform_indices = @transform_2, window_bounds = array<i64: 1, 32>}, {pipeline_mode = #tpu.pipeline_mode<synchronous>, transform_indices = @transform_3, window_bounds = array<i64: 32, 64>}, {pipeline_mode = #tpu.pipeline_mode<synchronous>, transform_indices = @transform_4, window_bounds = array<i64: 1, 64>}, {pipeline_mode = #tpu.pipeline_mode<synchronous>, transform_indices = @transform_5, window_bounds = array<i64: 1, 64>}, {pipeline_mode = #tpu.pipeline_mode<synchronous>, transform_indices = @transform_6, window_bounds = array<i64: 1, 64>}, {transform_indices = @transform_7, window_bounds = array<i64: 64, 128>}, {transform_indices = @transform_8, window_bounds = array<i64: 1, 128>}, {transform_indices = @transform_9, window_bounds = array<i64: 16, 128>}, {pipeline_mode = #tpu.pipeline_mode<synchronous>, transform_indices = @transform_10, window_bounds = array<i64: 16, 32>}]} {
    %c0_i32 = arith.constant 0 : i32
    %0 = arith.cmpi eq, %arg0, %c0_i32 : i32
    %1 = arith.extui %0 : i1 to i32
    %c0_i32_0 = arith.constant 0 : i32
    %2 = arith.cmpi ne, %1, %c0_i32_0 : i32
    scf.if %2 {
      %c0_8 = arith.constant 0 : index
      %c0_9 = arith.constant 0 : index
      %10 = vector.load %arg1[%c0_8, %c0_9] : memref<16x128xbf16, #tpu.memory_space<vmem>>, vector<16x128xbf16>
      %c0_10 = arith.constant 0 : index
      %c0_11 = arith.constant 0 : index
      %11 = vector.load %arg2[%c0_10, %c0_11] : memref<128x32xbf16, #tpu.memory_space<vmem>>, vector<128x32xbf16>
      %cst_12 = arith.constant dense<0.000000e+00> : vector<16x32xf32>
      %12 = tpu.matmul %10, %11, %cst_12 {dimension_numbers = #tpu.dot_dimension_numbers<[1], [0], [0], [1], [0, 0, 1, 1], [], []>} : vector<16x128xbf16>, vector<128x32xbf16>, vector<16x32xf32> -> vector<16x32xf32>
      %c0_13 = arith.constant 0 : index
      %c0_14 = arith.constant 0 : index
      %13 = vector.load %arg3[%c0_13, %c0_14] : memref<1x32xf32, #tpu.memory_space<vmem>>, vector<1x32xf32>
      %14 = vector.broadcast %13 : vector<1x32xf32> to vector<16x32xf32>
      %15 = arith.addf %12, %14 : vector<16x32xf32>
      %16 = math.tanh %15 : vector<16x32xf32>
      %c0_15 = arith.constant 0 : index
      %c0_16 = arith.constant 0 : index
      %17 = vector.load %arg11[%c0_15, %c0_16] : memref<16x32xf32, #tpu.memory_space<vmem>>, vector<16x32xf32>
      tpu.vector_store %arg11[%c0_15, %c0_16], %16 {strides = array<i32>} : memref<16x32xf32, #tpu.memory_space<vmem>>, vector<16x32xf32>,
      %18 = arith.truncf %16 : vector<16x32xf32> to vector<16x32xbf16>
      %c0_17 = arith.constant 0 : index
      %c0_18 = arith.constant 0 : index
      %19 = vector.load %arg4[%c0_17, %c0_18] : memref<32x64xbf16, #tpu.memory_space<vmem>>, vector<32x64xbf16>
      %cst_19 = arith.constant dense<0.000000e+00> : vector<16x64xf32>
      %20 = tpu.matmul %18, %19, %cst_19 {dimension_numbers = #tpu.dot_dimension_numbers<[1], [0], [0], [1], [0, 0, 1, 1], [], []>} : vector<16x32xbf16>, vector<32x64xbf16>, vector<16x64xf32> -> vector<16x64xf32>
      %c0_20 = arith.constant 0 : index
      %c0_21 = arith.constant 0 : index
      %21 = vector.load %arg5[%c0_20, %c0_21] : memref<1x64xf32, #tpu.memory_space<vmem>>, vector<1x64xf32>
      %22 = vector.broadcast %21 : vector<1x64xf32> to vector<16x64xf32>
      %23 = arith.addf %20, %22 : vector<16x64xf32>
      %cst_22 = arith.constant 5.000000e-01 : f32
      %24 = vector.broadcast %cst_22 : f32 to vector<16x64xf32>
      %25 = arith.mulf %23, %24 : vector<16x64xf32>
      %cst_23 = arith.constant 0.707106769 : f32
      %26 = vector.broadcast %cst_23 : f32 to vector<16x64xf32>
      %27 = arith.mulf %23, %26 : vector<16x64xf32>
      %28 = math.erf %27 : vector<16x64xf32>
      %cst_24 = arith.constant 1.000000e+00 : f32
      %29 = vector.broadcast %cst_24 : f32 to vector<16x64xf32>
      %30 = arith.addf %29, %28 : vector<16x64xf32>
      %31 = arith.mulf %25, %30 : vector<16x64xf32>
      %cst_25 = arith.constant dense<0.000000e+00> : vector<16xf32>
      %32 = vector.multi_reduction <add>, %31, %cst_25 [1] : vector<16x64xf32> to vector<16xf32>
      %33 = vector.shape_cast %32 : vector<16xf32> to vector<16x1xf32>
      %cst_26 = arith.constant 6.400000e+01 : f32
      %34 = vector.broadcast %cst_26 : f32 to vector<16x1xf32>
      %35 = arith.divf %33, %34 : vector<16x1xf32>
      %36 = vector.broadcast %35 : vector<16x1xf32> to vector<16x64xf32>
      %37 = arith.subf %31, %36 : vector<16x64xf32>
      %38 = vector.broadcast %35 : vector<16x1xf32> to vector<16x64xf32>
      %39 = arith.subf %31, %38 : vector<16x64xf32>
      %40 = arith.mulf %37, %39 : vector<16x64xf32>
      %cst_27 = arith.constant dense<0.000000e+00> : vector<16xf32>
      %41 = vector.multi_reduction <add>, %40, %cst_27 [1] : vector<16x64xf32> to vector<16xf32>
      %42 = vector.shape_cast %41 : vector<16xf32> to vector<16x1xf32>
      %cst_28 = arith.constant 6.400000e+01 : f32
      %43 = vector.broadcast %cst_28 : f32 to vector<16x1xf32>
      %44 = arith.divf %42, %43 : vector<16x1xf32>
      %45 = vector.broadcast %35 : vector<16x1xf32> to vector<16x64xf32>
      %46 = arith.subf %31, %45 : vector<16x64xf32>
      %cst_29 = arith.constant 9.99999996E-13 : f32
      %47 = vector.broadcast %cst_29 : f32 to vector<16x1xf32>
      %48 = arith.addf %44, %47 : vector<16x1xf32>
      %49 = math.rsqrt %48 : vector<16x1xf32>
      %50 = vector.broadcast %49 : vector<16x1xf32> to vector<16x64xf32>
      %51 = arith.mulf %46, %50 : vector<16x64xf32>
      %c0_30 = arith.constant 0 : index
      %c0_31 = arith.constant 0 : index
      %52 = vector.load %arg6[%c0_30, %c0_31] : memref<1x64xf32, #tpu.memory_space<vmem>>, vector<1x64xf32>
      %53 = vector.broadcast %52 : vector<1x64xf32> to vector<16x64xf32>
      %54 = arith.mulf %51, %53 : vector<16x64xf32>
      %c0_32 = arith.constant 0 : index
      %c0_33 = arith.constant 0 : index
      %55 = vector.load %arg7[%c0_32, %c0_33] : memref<1x64xf32, #tpu.memory_space<vmem>>, vector<1x64xf32>
      %56 = vector.broadcast %55 : vector<1x64xf32> to vector<16x64xf32>
      %57 = arith.addf %54, %56 : vector<16x64xf32>
      %58 = arith.truncf %57 : vector<16x64xf32> to vector<16x64xbf16>
      %c0_34 = arith.constant 0 : index
      %c0_35 = arith.constant 0 : index
      %59 = vector.load %arg12[%c0_34, %c0_35] : memref<16x64xbf16, #tpu.memory_space<vmem>>, vector<16x64xbf16>
      tpu.vector_store %arg12[%c0_34, %c0_35], %58 {strides = array<i32>} : memref<16x64xbf16, #tpu.memory_space<vmem>>, vector<16x64xbf16>,
    } else {
    }
    %c0 = arith.constant 0 : index
    %c0_1 = arith.constant 0 : index
    %3 = vector.load %arg12[%c0, %c0_1] : memref<16x64xbf16, #tpu.memory_space<vmem>>, vector<16x64xbf16>
    %c0_2 = arith.constant 0 : index
    %c0_3 = arith.constant 0 : index
    %4 = vector.load %arg8[%c0_2, %c0_3] : memref<64x128xbf16, #tpu.memory_space<vmem>>, vector<64x128xbf16>
    %cst = arith.constant dense<0.000000e+00> : vector<16x128xf32>
    %5 = tpu.matmul %3, %4, %cst {dimension_numbers = #tpu.dot_dimension_numbers<[1], [0], [0], [1], [0, 0, 1, 1], [], []>} : vector<16x64xbf16>, vector<64x128xbf16>, vector<16x128xf32> -> vector<16x128xf32>
    %c0_4 = arith.constant 0 : index
    %c0_5 = arith.constant 0 : index
    %6 = vector.load %arg9[%c0_4, %c0_5] : memref<1x128xf32, #tpu.memory_space<vmem>>, vector<1x128xf32>
    %7 = vector.broadcast %6 : vector<1x128xf32> to vector<16x128xf32>
    %8 = arith.addf %5, %7 : vector<16x128xf32>
    %c0_6 = arith.constant 0 : index
    %c0_7 = arith.constant 0 : index
    %9 = vector.load %arg10[%c0_6, %c0_7] : memref<16x128xf32, #tpu.memory_space<vmem>>, vector<16x128xf32>
    tpu.vector_store %arg10[%c0_6, %c0_7], %8 {strides = array<i32>} : memref<16x128xf32, #tpu.memory_space<vmem>>, vector<16x128xf32>,
    return
  }
  func.func @transform_0(%arg0: i32) -> (i32, i32) {
    %c0_i32 = arith.constant 0 : i32
    %c0_i32_0 = arith.constant 0 : i32
    %c0_i32_1 = arith.constant 0 : i32
    return %c0_i32, %c0_i32_0 : i32, i32
  }
  func.func @transform_1(%arg0: i32) -> (i32, i32) {
    %c0_i32 = arith.constant 0 : i32
    %c0_i32_0 = arith.constant 0 : i32
    %c0_i32_1 = arith.constant 0 : i32
    return %c0_i32, %c0_i32_0 : i32, i32
  }
  func.func @transform_2(%arg0: i32) -> (i32, i32) {
    %c0_i32 = arith.constant 0 : i32
    %c0_i32_0 = arith.constant 0 : i32
    %c0_i32_1 = arith.constant 0 : i32
    return %c0_i32, %c0_i32_0 : i32, i32
  }
  func.func @transform_3(%arg0: i32) -> (i32, i32) {
    %c0_i32 = arith.constant 0 : i32
    %c0_i32_0 = arith.constant 0 : i32
    %c0_i32_1 = arith.constant 0 : i32
    return %c0_i32, %c0_i32_0 : i32, i32
  }
  func.func @transform_4(%arg0: i32) -> (i32, i32) {
    %c0_i32 = arith.constant 0 : i32
    %c0_i32_0 = arith.constant 0 : i32
    %c0_i32_1 = arith.constant 0 : i32
    return %c0_i32, %c0_i32_0 : i32, i32
  }
  func.func @transform_5(%arg0: i32) -> (i32, i32) {
    %c0_i32 = arith.constant 0 : i32
    %c0_i32_0 = arith.constant 0 : i32
    %c0_i32_1 = arith.constant 0 : i32
    return %c0_i32, %c0_i32_0 : i32, i32
  }
  func.func @transform_6(%arg0: i32) -> (i32, i32) {
    %c0_i32 = arith.constant 0 : i32
    %c0_i32_0 = arith.constant 0 : i32
    %c0_i32_1 = arith.constant 0 : i32
    return %c0_i32, %c0_i32_0 : i32, i32
  }
  func.func @transform_7(%arg0: i32) -> (i32, i32) {
    %c0_i32 = arith.constant 0 : i32
    %c0_i32_0 = arith.constant 0 : i32
    return %c0_i32, %arg0 : i32, i32
  }
  func.func @transform_8(%arg0: i32) -> (i32, i32) {
    %c0_i32 = arith.constant 0 : i32
    %c0_i32_0 = arith.constant 0 : i32
    return %c0_i32, %arg0 : i32, i32
  }
  func.func @transform_9(%arg0: i32) -> (i32, i32) {
    %c0_i32 = arith.constant 0 : i32
    %c0_i32_0 = arith.constant 0 : i32
    return %c0_i32, %arg0 : i32, i32
  }
  func.func @transform_10(%arg0: i32) -> (i32, i32) {
    %c0_i32 = arith.constant 0 : i32
    %c0_i32_0 = arith.constant 0 : i32
    %c0_i32_1 = arith.constant 0 : i32
    return %c0_i32, %c0_i32_0 : i32, i32
  }
}

module attributes {stable_mosaic.version = 11 : i64} {
  func.func @gqa_fused_kernel(%arg0: i32, %arg1: memref<16x128xbf16, #tpu.memory_space<vmem>>, %arg2: memref<128x32xbf16, #tpu.memory_space<vmem>>, %arg3: memref<1x32xf32, #tpu.memory_space<vmem>>, %arg4: memref<32x64xbf16, #tpu.memory_space<vmem>>, %arg5: memref<1x64xf32, #tpu.memory_space<vmem>>, %arg6: memref<1x64xf32, #tpu.memory_space<vmem>>, %arg7: memref<1x64xf32, #tpu.memory_space<vmem>>, %arg8: memref<64x128xbf16, #tpu.memory_space<vmem>>, %arg9: memref<1x128xf32, #tpu.memory_space<vmem>>, %arg10: memref<16x128xf32, #tpu.memory_space<vmem>>, %arg11: memref<16x32xf32, #tpu.memory_space<vmem>>, %arg12: memref<16x64xbf16, #tpu.memory_space<vmem>>) attributes {dimension_semantics = [#tpu.dimension_semantics<arbitrary>], iteration_bounds = array<i64: 1>, scalar_prefetch = 0 : i64, scratch_operands = 1 : i64, tpu.core_type = #tpu.core_type<tc>, window_params = [{pipeline_mode = #tpu.pipeline_mode<synchronous>, transform_indices = @transform_0, window_bounds = array<i64: 16, 128>}, {pipeline_mode = #tpu.pipeline_mode<synchronous>, transform_indices = @transform_1, window_bounds = array<i64: 128, 32>}, {pipeline_mode = #tpu.pipeline_mode<synchronous>, transform_indices = @transform_2, window_bounds = array<i64: 1, 32>}, {pipeline_mode = #tpu.pipeline_mode<synchronous>, transform_indices = @transform_3, window_bounds = array<i64: 32, 64>}, {pipeline_mode = #tpu.pipeline_mode<synchronous>, transform_indices = @transform_4, window_bounds = array<i64: 1, 64>}, {pipeline_mode = #tpu.pipeline_mode<synchronous>, transform_indices = @transform_5, window_bounds = array<i64: 1, 64>}, {pipeline_mode = #tpu.pipeline_mode<synchronous>, transform_indices = @transform_6, window_bounds = array<i64: 1, 64>}, {transform_indices = @transform_7, window_bounds = array<i64: 64, 128>}, {transform_indices = @transform_8, window_bounds = array<i64: 1, 128>}, {transform_indices = @transform_9, window_bounds = array<i64: 16, 128>}, {pipeline_mode = #tpu.pipeline_mode<synchronous>, transform_indices = @transform_10, window_bounds = array<i64: 16, 32>}]} {
    %c0_i32 = arith.constant 0 : i32
    %0 = arith.cmpi eq, %arg0, %c0_i32 : i32
    %1 = arith.extui %0 : i1 to i32
    %c0_i32_0 = arith.constant 0 : i32
    %2 = arith.cmpi ne, %1, %c0_i32_0 : i32
    scf.if %2 {
      %c0_8 = arith.constant 0 : index
      %c0_9 = arith.constant 0 : index
      %10 = vector.load %arg1[%c0_8, %c0_9] : memref<16x128xbf16, #tpu.memory_space<vmem>>, vector<16x128xbf16>
      %c0_10 = arith.constant 0 : index
      %c0_11 = arith.constant 0 : index
      %11 = vector.load %arg2[%c0_10, %c0_11] : memref<128x32xbf16, #tpu.memory_space<vmem>>, vector<128x32xbf16>
      %cst_12 = arith.constant dense<0.000000e+00> : vector<16x32xf32>
      %12 = tpu.matmul %10, %11, %cst_12 {dimension_numbers = #tpu.dot_dimension_numbers<[1], [0], [0], [1], [0, 0, 1, 1], [], []>} : vector<16x128xbf16>, vector<128x32xbf16>, vector<16x32xf32> -> vector<16x32xf32>
      %c0_13 = arith.constant 0 : index
      %c0_14 = arith.constant 0 : index
      %13 = vector.load %arg3[%c0_13, %c0_14] : memref<1x32xf32, #tpu.memory_space<vmem>>, vector<1x32xf32>
      %14 = vector.broadcast %13 : vector<1x32xf32> to vector<16x32xf32>
      %15 = arith.addf %12, %14 : vector<16x32xf32>
      %16 = math.tanh %15 : vector<16x32xf32>
      %c0_15 = arith.constant 0 : index
      %c0_16 = arith.constant 0 : index
      %17 = vector.load %arg11[%c0_15, %c0_16] : memref<16x32xf32, #tpu.memory_space<vmem>>, vector<16x32xf32>
      tpu.vector_store %arg11[%c0_15, %c0_16], %16 {strides = array<i32>} : memref<16x32xf32, #tpu.memory_space<vmem>>, vector<16x32xf32>,
      %18 = arith.truncf %16 : vector<16x32xf32> to vector<16x32xbf16>
      %c0_17 = arith.constant 0 : index
      %c0_18 = arith.constant 0 : index
      %19 = vector.load %arg4[%c0_17, %c0_18] : memref<32x64xbf16, #tpu.memory_space<vmem>>, vector<32x64xbf16>
      %cst_19 = arith.constant dense<0.000000e+00> : vector<16x64xf32>
      %20 = tpu.matmul %18, %19, %cst_19 {dimension_numbers = #tpu.dot_dimension_numbers<[1], [0], [0], [1], [0, 0, 1, 1], [], []>} : vector<16x32xbf16>, vector<32x64xbf16>, vector<16x64xf32> -> vector<16x64xf32>
      %c0_20 = arith.constant 0 : index
      %c0_21 = arith.constant 0 : index
      %21 = vector.load %arg5[%c0_20, %c0_21] : memref<1x64xf32, #tpu.memory_space<vmem>>, vector<1x64xf32>
      %22 = vector.broadcast %21 : vector<1x64xf32> to vector<16x64xf32>
      %23 = arith.addf %20, %22 : vector<16x64xf32>
      %cst_22 = arith.constant 5.000000e-01 : f32
      %24 = vector.broadcast %cst_22 : f32 to vector<16x64xf32>
      %25 = arith.mulf %23, %24 : vector<16x64xf32>
      %cst_23 = arith.constant 0.707106769 : f32
      %26 = vector.broadcast %cst_23 : f32 to vector<16x64xf32>
      %27 = arith.mulf %23, %26 : vector<16x64xf32>
      %28 = math.erf %27 : vector<16x64xf32>
      %cst_24 = arith.constant 1.000000e+00 : f32
      %29 = vector.broadcast %cst_24 : f32 to vector<16x64xf32>
      %30 = arith.addf %29, %28 : vector<16x64xf32>
      %31 = arith.mulf %25, %30 : vector<16x64xf32>
      %cst_25 = arith.constant dense<0.000000e+00> : vector<16xf32>
      %32 = vector.multi_reduction <add>, %31, %cst_25 [1] : vector<16x64xf32> to vector<16xf32>
      %33 = vector.shape_cast %32 : vector<16xf32> to vector<16x1xf32>
      %cst_26 = arith.constant 6.400000e+01 : f32
      %34 = vector.broadcast %cst_26 : f32 to vector<16x1xf32>
      %35 = arith.divf %33, %34 : vector<16x1xf32>
      %36 = vector.broadcast %35 : vector<16x1xf32> to vector<16x64xf32>
      %37 = arith.subf %31, %36 : vector<16x64xf32>
      %38 = vector.broadcast %35 : vector<16x1xf32> to vector<16x64xf32>
      %39 = arith.subf %31, %38 : vector<16x64xf32>
      %40 = arith.mulf %37, %39 : vector<16x64xf32>
      %cst_27 = arith.constant dense<0.000000e+00> : vector<16xf32>
      %41 = vector.multi_reduction <add>, %40, %cst_27 [1] : vector<16x64xf32> to vector<16xf32>
      %42 = vector.shape_cast %41 : vector<16xf32> to vector<16x1xf32>
      %cst_28 = arith.constant 6.400000e+01 : f32
      %43 = vector.broadcast %cst_28 : f32 to vector<16x1xf32>
      %44 = arith.divf %42, %43 : vector<16x1xf32>
      %45 = vector.broadcast %35 : vector<16x1xf32> to vector<16x64xf32>
      %46 = arith.subf %31, %45 : vector<16x64xf32>
      %cst_29 = arith.constant 9.99999996E-13 : f32
      %47 = vector.broadcast %cst_29 : f32 to vector<16x1xf32>
      %48 = arith.addf %44, %47 : vector<16x1xf32>
      %49 = math.rsqrt %48 : vector<16x1xf32>
      %50 = vector.broadcast %49 : vector<16x1xf32> to vector<16x64xf32>
      %51 = arith.mulf %46, %50 : vector<16x64xf32>
      %c0_30 = arith.constant 0 : index
      %c0_31 = arith.constant 0 : index
      %52 = vector.load %arg6[%c0_30, %c0_31] : memref<1x64xf32, #tpu.memory_space<vmem>>, vector<1x64xf32>
      %53 = vector.broadcast %52 : vector<1x64xf32> to vector<16x64xf32>
      %54 = arith.mulf %51, %53 : vector<16x64xf32>
      %c0_32 = arith.constant 0 : index
      %c0_33 = arith.constant 0 : index
      %55 = vector.load %arg7[%c0_32, %c0_33] : memref<1x64xf32, #tpu.memory_space<vmem>>, vector<1x64xf32>
      %56 = vector.broadcast %55 : vector<1x64xf32> to vector<16x64xf32>
      %57 = arith.addf %54, %56 : vector<16x64xf32>
      %58 = arith.truncf %57 : vector<16x64xf32> to vector<16x64xbf16>
      %c0_34 = arith.constant 0 : index
      %c0_35 = arith.constant 0 : index
      %59 = vector.load %arg12[%c0_34, %c0_35] : memref<16x64xbf16, #tpu.memory_space<vmem>>, vector<16x64xbf16>
      tpu.vector_store %arg12[%c0_34, %c0_35], %58 {strides = array<i32>} : memref<16x64xbf16, #tpu.memory_space<vmem>>, vector<16x64xbf16>,
    } else {
    }
    %c0 = arith.constant 0 : index
    %c0_1 = arith.constant 0 : index
    %3 = vector.load %arg12[%c0, %c0_1] : memref<16x64xbf16, #tpu.memory_space<vmem>>, vector<16x64xbf16>
    %c0_2 = arith.constant 0 : index
    %c0_3 = arith.constant 0 : index
    %4 = vector.load %arg8[%c0_2, %c0_3] : memref<64x128xbf16, #tpu.memory_space<vmem>>, vector<64x128xbf16>
    %cst = arith.constant dense<0.000000e+00> : vector<16x128xf32>
    %5 = tpu.matmul %3, %4, %cst {dimension_numbers = #tpu.dot_dimension_numbers<[1], [0], [0], [1], [0, 0, 1, 1], [], []>} : vector<16x64xbf16>, vector<64x128xbf16>, vector<16x128xf32> -> vector<16x128xf32>
    %c0_4 = arith.constant 0 : index
    %c0_5 = arith.constant 0 : index
    %6 = vector.load %arg9[%c0_4, %c0_5] : memref<1x128xf32, #tpu.memory_space<vmem>>, vector<1x128xf32>
    %7 = vector.broadcast %6 : vector<1x128xf32> to vector<16x128xf32>
    %8 = arith.addf %5, %7 : vector<16x128xf32>
    %c0_6 = arith.constant 0 : index
    %c0_7 = arith.constant 0 : index
    %9 = vector.load %arg10[%c0_6, %c0_7] : memref<16x128xf32, #tpu.memory_space<vmem>>, vector<16x128xf32>
    tpu.vector_store %arg10[%c0_6, %c0_7], %8 {strides = array<i32>} : memref<16x128xf32, #tpu.memory_space<vmem>>, vector<16x128xf32>,
    return
  }
  func.func @transform_0(%arg0: i32) -> (i32, i32) {
    %c0_i32 = arith.constant 0 : i32
    %c0_i32_0 = arith.constant 0 : i32
    %c0_i32_1 = arith.constant 0 : i32
    return %c0_i32, %c0_i32_0 : i32, i32
  }
  func.func @transform_1(%arg0: i32) -> (i32, i32) {
    %c0_i32 = arith.constant 0 : i32
    %c0_i32_0 = arith.constant 0 : i32
    %c0_i32_1 = arith.constant 0 : i32
    return %c0_i32, %c0_i32_0 : i32, i32
  }
  func.func @transform_2(%arg0: i32) -> (i32, i32) {
    %c0_i32 = arith.constant 0 : i32
    %c0_i32_0 = arith.constant 0 : i32
    %c0_i32_1 = arith.constant 0 : i32
    return %c0_i32, %c0_i32_0 : i32, i32
  }
  func.func @transform_3(%arg0: i32) -> (i32, i32) {
    %c0_i32 = arith.constant 0 : i32
    %c0_i32_0 = arith.constant 0 : i32
    %c0_i32_1 = arith.constant 0 : i32
    return %c0_i32, %c0_i32_0 : i32, i32
  }
  func.func @transform_4(%arg0: i32) -> (i32, i32) {
    %c0_i32 = arith.constant 0 : i32
    %c0_i32_0 = arith.constant 0 : i32
    %c0_i32_1 = arith.constant 0 : i32
    return %c0_i32, %c0_i32_0 : i32, i32
  }
  func.func @transform_5(%arg0: i32) -> (i32, i32) {
    %c0_i32 = arith.constant 0 : i32
    %c0_i32_0 = arith.constant 0 : i32
    %c0_i32_1 = arith.constant 0 : i32
    return %c0_i32, %c0_i32_0 : i32, i32
  }
  func.func @transform_6(%arg0: i32) -> (i32, i32) {
    %c0_i32 = arith.constant 0 : i32
    %c0_i32_0 = arith.constant 0 : i32
    %c0_i32_1 = arith.constant 0 : i32
    return %c0_i32, %c0_i32_0 : i32, i32
  }
  func.func @transform_7(%arg0: i32) -> (i32, i32) {
    %c0_i32 = arith.constant 0 : i32
    %c0_i32_0 = arith.constant 0 : i32
    return %c0_i32, %arg0 : i32, i32
  }
  func.func @transform_8(%arg0: i32) -> (i32, i32) {
    %c0_i32 = arith.constant 0 : i32
    %c0_i32_0 = arith.constant 0 : i32
    return %c0_i32, %arg0 : i32, i32
  }
  func.func @transform_9(%arg0: i32) -> (i32, i32) {
    %c0_i32 = arith.constant 0 : i32
    %c0_i32_0 = arith.constant 0 : i32
    return %c0_i32, %arg0 : i32, i32
  }
  func.func @transform_10(%arg0: i32) -> (i32, i32) {
    %c0_i32 = arith.constant 0 : i32
    %c0_i32_0 = arith.constant 0 : i32
    %c0_i32_1 = arith.constant 0 : i32
    return %c0_i32, %c0_i32_0 : i32, i32
  }
}

</mosaic_0001>

<llo_original>
// kernel: _forward_impl.1
$region0: #{_forward_impl.1}
  #allocation0 [shape = 'u32[]', space=smem, size = 0x4, offset = 0x4, fixed_abs, tag = 'smem constant byte address 0x4 - core index']
  #allocation1 [shape = 'u32[144,128]{1,0:T(1,128)}', space=vmem, size = 0x12000, scoped, tag = 'internal scratch']
  #allocation2 [shape = 'bf16[16,64]{1,0:T(8,128)(2,1)}', space=vmem, size = 0x1000, scoped, tag = 'scratch operand']
  %s0 = inlined_call_operand.vmem [shape: bf16[16,128], index: 0, kind: input, shape index: {}]
  %s1 = inlined_call_operand.vmem [shape: bf16[128,32], index: 1, kind: input, shape index: {}]
  %s2 = inlined_call_operand.vmem [shape: f32[1,32], index: 2, kind: input, shape index: {}]
  %s3 = inlined_call_operand.vmem [shape: bf16[32,64], index: 3, kind: input, shape index: {}]
  %s4 = inlined_call_operand.vmem [shape: f32[1,64], index: 4, kind: input, shape index: {}]
  %s5 = inlined_call_operand.vmem [shape: f32[1,64], index: 5, kind: input, shape index: {}]
  %s6 = inlined_call_operand.vmem [shape: f32[1,64], index: 6, kind: input, shape index: {}]
  %s7 = inlined_call_operand.vmem [shape: bf16[64,128], index: 7, kind: input, shape index: {}]
  %s8 = inlined_call_operand.vmem [shape: f32[1,128], index: 8, kind: input, shape index: {}]
  %s9 = inlined_call_operand.vmem [shape: f32[16,128], index: 9, kind: output, shape index: {0}]
  %s10 = inlined_call_operand.vmem [shape: f32[16,32], index: 10, kind: output, shape index: {1}]
  %11 = xla_tuple %s9, %s10
  %s12 = sld [smem:[#allocation0]]
  $region58: #{_forward_impl.1} parent=0
    _
  %s14 = ssub.s32 1, %s12
  %s15 = scalar_select 0, %s14, %s12
  // Predicated region
  $region2: #{_forward_impl.1} parent=0 // pred_check
    _
  $region3: #{_forward_impl.1} parent=0 // pred_check_branch
    %17 = sbr.rel (0) target = $region5
  $region4: #{_forward_impl.1} parent=0 // pred_region
    _
  $region5: #{_forward_impl.1} parent=0 // pred_fallthru
    _
  // Predicated region
  $region6: #{_forward_impl.1} parent=0 // pred_check
    _
  $region7: #{_forward_impl.1} parent=0 // pred_check_branch
    %19 = sbr.rel (0) target = $region9
  $region8: #{_forward_impl.1} parent=0 // pred_region
    _
  $region9: #{_forward_impl.1} parent=0 // pred_fallthru
    _
  // Predicated region
  $region10: #{_forward_impl.1} parent=0 // pred_check
    _
  $region11: #{_forward_impl.1} parent=0 // pred_check_branch
    %21 = sbr.rel (0) target = $region13
  $region12: #{_forward_impl.1} parent=0 // pred_region
    _
  $region13: #{_forward_impl.1} parent=0 // pred_fallthru
    _
  // Predicated region
  $region14: #{_forward_impl.1} parent=0 // pred_check
    _
  $region15: #{_forward_impl.1} parent=0 // pred_check_branch
    %23 = sbr.rel (0) target = $region17
  $region16: #{_forward_impl.1} parent=0 // pred_region
    _
  $region17: #{_forward_impl.1} parent=0 // pred_fallthru
    _
  // Predicated region
  $region18: #{_forward_impl.1} parent=0 // pred_check
    _
  $region19: #{_forward_impl.1} parent=0 // pred_check_branch
    %25 = sbr.rel (0) target = $region21
  $region20: #{_forward_impl.1} parent=0 // pred_region
    _
  $region21: #{_forward_impl.1} parent=0 // pred_fallthru
    _
  // Predicated region
  $region22: #{_forward_impl.1} parent=0 // pred_check
    _
  $region23: #{_forward_impl.1} parent=0 // pred_check_branch
    %27 = sbr.rel (0) target = $region25
  $region24: #{_forward_impl.1} parent=0 // pred_region
    _
  $region25: #{_forward_impl.1} parent=0 // pred_fallthru
    _
  // Predicated region
  $region26: #{_forward_impl.1} parent=0 // pred_check
    _
  $region27: #{_forward_impl.1} parent=0 // pred_check_branch
    %29 = sbr.rel (0) target = $region29
  $region28: #{_forward_impl.1} parent=0 // pred_region
    _
  $region29: #{_forward_impl.1} parent=0 // pred_fallthru
    _
  // Predicated region
  $region30: #{_forward_impl.1} parent=0 // pred_check
    _
  $region31: #{_forward_impl.1} parent=0 // pred_check_branch
    %31 = sbr.rel (0) target = $region33
  $region32: #{_forward_impl.1} parent=0 // pred_region
    _
  $region33: #{_forward_impl.1} parent=0 // pred_fallthru
    _
  // Predicated region
  $region34: #{_forward_impl.1} parent=0 // pred_check
    _
  $region35: #{_forward_impl.1} parent=0 // pred_check_branch
    %33 = sbr.rel (0) target = $region37
  $region36: #{_forward_impl.1} parent=0 // pred_region
    _
  $region37: #{_forward_impl.1} parent=0 // pred_fallthru
    _
  %p35 = scmp.eq.s32.totalorder 0, 0
  // Predicated region
  $region38: #{_forward_impl.1} parent=0 // pred_check
    %p36 = pneg %p35
  $region39: #{_forward_impl.1} parent=0 // pred_check_branch
    %38 = sbr.rel (%p36) target = $region41
  $region40: #{_forward_impl.1} parent=0 // pred_region
    %v39 = vld [vmem:[%s0] sm:$0xf]
    %v40 = vld [vmem:[%s0 + $0x4] sm:$0xf]
    %v41 = vld [vmem:[%s1] sm:$0xf]
    %v42 = vld [vmem:[%s1 + $0x4] sm:$0xf]
    %v43 = vld [vmem:[%s1 + $0x8] sm:$0xf]
    %v44 = vld [vmem:[%s1 + $0xc] sm:$0xf]
    %v45 = vld [vmem:[%s1 + $0x10] sm:$0xf]
    %v46 = vld [vmem:[%s1 + $0x14] sm:$0xf]
    %v47 = vld [vmem:[%s1 + $0x18] sm:$0xf]
    %v48 = vld [vmem:[%s1 + $0x1c] sm:$0xf]
    %v49 = vld [vmem:[%s1 + $0x20] sm:$0xf]
    %v50 = vld [vmem:[%s1 + $0x24] sm:$0xf]
    %v51 = vld [vmem:[%s1 + $0x28] sm:$0xf]
    %v52 = vld [vmem:[%s1 + $0x2c] sm:$0xf]
    %v53 = vld [vmem:[%s1 + $0x30] sm:$0xf]
    %v54 = vld [vmem:[%s1 + $0x34] sm:$0xf]
    %v55 = vld [vmem:[%s1 + $0x38] sm:$0xf]
    %v56 = vld [vmem:[%s1 + $0x3c] sm:$0xf]
    %v57 = vld [vmem:[%s2] sm:$0x1]
    %v59 = vlaneseq
    %v60 = vshrl.u32 %v59, 7
    %v61 = vsub.s32 0, %v60
    %v62 = vrot.slane %v57, %v61
    %v66 = vunpack.c.l.b16 %v39
    %v67 = vunpack.c.l.b16 %v40
    %v68 = vpack.c.b16 %v67, %v66
    %v86 = vunpack.c.l.b16 %v41
    %v87 = vunpack.c.l.b16 %v42
    %v88 = vunpack.c.l.b16 %v43
    %v89 = vunpack.c.l.b16 %v44
    %v90 = vunpack.c.l.b16 %v45
    %v91 = vunpack.c.l.b16 %v46
    %v92 = vunpack.c.l.b16 %v47
    %v93 = vunpack.c.l.b16 %v48
    %v94 = vunpack.c.l.b16 %v49
    %v95 = vunpack.c.l.b16 %v50
    %v96 = vunpack.c.l.b16 %v51
    %v97 = vunpack.c.l.b16 %v52
    %v98 = vunpack.c.l.b16 %v53
    %v99 = vunpack.c.l.b16 %v54
    %v100 = vunpack.c.l.b16 %v55
    %v101 = vunpack.c.l.b16 %v56
    %v102 = vpack.c.b16 %v87, %v86
    %v103 = vpack.c.b16 %v89, %v88
    %v104 = vpack.c.b16 %v91, %v90
    %v105 = vpack.c.b16 %v93, %v92
    %v106 = vpack.c.b16 %v95, %v94
    %v107 = vpack.c.b16 %v97, %v96
    %v108 = vpack.c.b16 %v99, %v98
    %v109 = vpack.c.b16 %v101, %v100
    %118 = vmatprep.subr.bf16.mxu0 0
    %119 = vmatpush1.bf16.msra.mxu0 %v109
    %120 = vmatprep.subr.bf16.mxu0 0
    %121 = vmatpush1.bf16.msra.mxu0 %v108
    %122 = vmatprep.subr.bf16.mxu0 0
    %123 = vmatpush1.bf16.msra.mxu0 %v107
    %124 = vmatprep.subr.bf16.mxu0 0
    %125 = vmatpush1.bf16.msra.mxu0 %v106
    %126 = vmatprep.subr.bf16.mxu0 0
    %127 = vmatpush1.bf16.msra.mxu0 %v105
    %128 = vmatprep.subr.bf16.mxu0 0
    %129 = vmatpush1.bf16.msra.mxu0 %v104
    %130 = vmatprep.subr.bf16.mxu0 0
    %131 = vmatpush1.bf16.msra.mxu0 %v103
    %132 = vmatprep.subr.bf16.mxu0 0
    %133 = vmatpush1.bf16.msra.mxu0 %v102
    %134 = vmatprep.subr.bf16.mxu0 0
    %135 = vmatpush2.bf16.msra.mxu0 0
    %136 = vmatprep.subr.bf16.mxu0 0
    %137 = vmatpush2.bf16.msra.mxu0 0
    %138 = vmatprep.subr.bf16.mxu0 0
    %139 = vmatpush2.bf16.msra.mxu0 0
    %140 = vmatprep.subr.bf16.mxu0 0
    %141 = vmatpush2.bf16.msra.mxu0 0
    %142 = vmatprep.subr.bf16.mxu0 0
    %143 = vmatpush2.bf16.msra.mxu0 0
    %144 = vmatprep.subr.bf16.mxu0 0
    %145 = vmatpush2.bf16.msra.mxu0 0
    %146 = vmatprep.subr.bf16.mxu0 0
    %147 = vmatpush2.bf16.msra.mxu0 0
    %148 = vmatprep.subr.bf16.mxu0 0
    %149 = vmatpush2.bf16.msra.mxu0 0
    %150 = vmatprep.mubr.bf16.mxu0 0
    %151 = vmatmul.mubr.bf16.gmra.mxu0 %v68
    %v152 = vpop.f32.mrf.mxu0
    %v153 = vadd.f32 %v62, %v152
    %v154 = vpop.f32.mrf.mxu0
    %v155 = vpop.f32.mrf.mxu0
    %v156 = vadd.f32 %v62, %v155
    %v157 = vpop.f32.mrf.mxu0
    %158 = vdwg.mxu0
    %v159 = vtanh.pop %v153
    %v160 = vtanh.pop %v156
    %vm161 = vcmask 261120
    %162 = vst.msk [vmem:[%s10] sm:$0xff] %vm161, %v159
    %163 = vst.msk [vmem:[%s10 + $0x8] sm:$0xff] %vm161, %v160
    %v164 = vpack.c.bf16 %v160, %v159
    %v165 = vld [vmem:[%s3] sm:$0xf]
    %v166 = vld [vmem:[%s3 + $0x4] sm:$0xf]
    %v167 = vld [vmem:[%s3 + $0x8] sm:$0xf]
    %v168 = vld [vmem:[%s3 + $0xc] sm:$0xf]
    %v169 = vld [vmem:[%s4] sm:$0x1]
    %v171 = vlaneseq
    %v172 = vshrl.u32 %v171, 7
    %v173 = vsub.s32 0, %v172
    %v174 = vrot.slane %v169, %v173
    %v180 = vunpack.c.l.b16 %v165
    %v181 = vunpack.c.l.b16 %v166
    %v182 = vunpack.c.l.b16 %v167
    %v183 = vunpack.c.l.b16 %v168
    %v184 = vpack.c.b16 %v181, %v180
    %v185 = vpack.c.b16 %v183, %v182
    %v189 = vsel %vm161, %v164, 0
    %191 = vmatprep.subr.bf16.mxu0 0
    %192 = vmatpush1.bf16.msra.mxu0 0
    %193 = vmatprep.subr.bf16.mxu0 0
    %194 = vmatpush1.bf16.msra.mxu0 0
    %195 = vmatprep.subr.bf16.mxu0 0
    %196 = vmatpush1.bf16.msra.mxu0 0
    %197 = vmatprep.subr.bf16.mxu0 0
    %198 = vmatpush1.bf16.msra.mxu0 0
    %199 = vmatprep.subr.bf16.mxu0 0
    %200 = vmatpush1.bf16.msra.mxu0 0
    %201 = vmatprep.subr.bf16.mxu0 0
    %202 = vmatpush1.bf16.msra.mxu0 0
    %203 = vmatprep.subr.bf16.mxu0 0
    %204 = vmatpush1.bf16.msra.mxu0 %v185
    %205 = vmatprep.subr.bf16.mxu0 0
    %206 = vmatpush1.bf16.msra.mxu0 %v184
    %207 = vmatprep.subr.bf16.mxu0 0
    %208 = vmatpush2.bf16.msra.mxu0 0
    %209 = vmatprep.subr.bf16.mxu0 0
    %210 = vmatpush2.bf16.msra.mxu0 0
    %211 = vmatprep.subr.bf16.mxu0 0
    %212 = vmatpush2.bf16.msra.mxu0 0
    %213 = vmatprep.subr.bf16.mxu0 0
    %214 = vmatpush2.bf16.msra.mxu0 0
    %215 = vmatprep.subr.bf16.mxu0 0
    %216 = vmatpush2.bf16.msra.mxu0 0
    %217 = vmatprep.subr.bf16.mxu0 0
    %218 = vmatpush2.bf16.msra.mxu0 0
    %219 = vmatprep.subr.bf16.mxu0 0
    %220 = vmatpush2.bf16.msra.mxu0 0
    %221 = vmatprep.subr.bf16.mxu0 0
    %222 = vmatpush2.bf16.msra.mxu0 0
    %223 = vmatprep.mubr.bf16.mxu0 0
    %224 = vmatmul.mubr.bf16.gmra.mxu0 %v189
    %v225 = vpop.f32.mrf.mxu0
    %v226 = vadd.f32 %v174, %v225
    %v227 = vpop.f32.mrf.mxu0
    %v228 = vpop.f32.mrf.mxu0
    %v229 = vadd.f32 %v174, %v228
    %v230 = vpop.f32.mrf.mxu0
    %231 = vdwg.mxu0
    %v232 = vmul.f32 %v226, 0.5
    %v233 = vmul.f32 %v229, 0.5
    %v234 = vmul.f32 %v226, 0.70710677
    %v235 = vmul.f32 %v229, 0.70710677
    %v236 = verf.f32.pop %v234
    %v237 = verf.f32.pop %v235
    %v238 = vadd.f32 %v236, 1.0
    %v239 = vadd.f32 %v237, 1.0
    %v240 = vmul.f32 %v232, %v238
    %v241 = vmul.f32 %v233, %v239
    %vm242 = vcmask 523264
    %v243 = vsel %vm242, %v240, 0.0
    %244 = vadd.xlane.f32.xlu0 %v243
    %v245 = vpop.xlane.xlu0 %244
    %v246 = vsel %vm242, %v241, 0.0
    %247 = vadd.xlane.f32.xlu0 %v246
    %v248 = vpop.xlane.xlu0 %247
    %v249 = vrcp.pop 64.0
    %v250 = vmul.f32 %v245, %v249
    %v251 = vmul.f32 %v248, %v249
    %v252 = vsub.f32 %v240, %v250
    %v253 = vsub.f32 %v241, %v251
    %v254 = vmul.f32 %v252, %v252
    %v255 = vmul.f32 %v253, %v253
    %v256 = vsel %vm242, %v254, 0.0
    %257 = vadd.xlane.f32.xlu0 %v256
    %v258 = vpop.xlane.xlu0 %257
    %v259 = vsel %vm242, %v255, 0.0
    %260 = vadd.xlane.f32.xlu0 %v259
    %v261 = vpop.xlane.xlu0 %260
    %v262 = vmul.f32 %v258, %v249
    %v263 = vmul.f32 %v261, %v249
    %v264 = vadd.f32 %v262, 1e-12
    %v265 = vadd.f32 %v263, 1e-12
    %v266 = vrsqrt.pop %v264
    %v267 = vrsqrt.pop %v265
    %v268 = vmul.f32 %v252, %v266
    %v269 = vmul.f32 %v253, %v267
    %v270 = vld [vmem:[%s5] sm:$0x1]
    %v272 = vlaneseq
    %v273 = vshrl.u32 %v272, 7
    %v274 = vsub.s32 0, %v273
    %v275 = vrot.slane %v270, %v274
    %v277 = vmul.f32 %v268, %v275
    %v278 = vmul.f32 %v269, %v275
    %v279 = vld [vmem:[%s6] sm:$0x1]
    %v281 = vlaneseq
    %v282 = vshrl.u32 %v281, 7
    %v283 = vsub.s32 0, %v282
    %v284 = vrot.slane %v279, %v283
    %v286 = vadd.f32 %v277, %v284
    %v287 = vadd.f32 %v278, %v284
    %v288 = vpack.c.bf16 %v287, %v286
    %v290 = vunpack.c.l.b16 %v288
    %v291 = vunpack.c.h.b16 %v288
    %v292 = vpack.c.b16 %v290, %v290
    %v293 = vpack.c.b16 %v291, %v291
    %vm296 = vcmask 519168
    %297 = vst.msk [vmem:[#allocation2] sm:$0xf] %vm296, %v292
    %298 = vst.msk [vmem:[#allocation2 + $0x4] sm:$0xf] %vm296, %v293
  $region41: #{_forward_impl.1} parent=0 // pred_fallthru
    _
  %v299 = vld [vmem:[#allocation2] sm:$0xf]
  %v300 = vld [vmem:[#allocation2 + $0x4] sm:$0xf]
  %v301 = vld [vmem:[%s7] sm:$0xf]
  %v302 = vld [vmem:[%s7 + $0x4] sm:$0xf]
  %v303 = vld [vmem:[%s7 + $0x8] sm:$0xf]
  %v304 = vld [vmem:[%s7 + $0xc] sm:$0xf]
  %v305 = vld [vmem:[%s7 + $0x10] sm:$0xf]
  %v306 = vld [vmem:[%s7 + $0x14] sm:$0xf]
  %v307 = vld [vmem:[%s7 + $0x18] sm:$0xf]
  %v308 = vld [vmem:[%s7 + $0x1c] sm:$0xf]
  %v309 = vld [vmem:[%s8] sm:$0x1]
  %v311 = vlaneseq
  %v312 = vshrl.u32 %v311, 7
  %v313 = vsub.s32 0, %v312
  %v314 = vrot.slane %v309, %v313
  %v318 = vunpack.c.l.b16 %v299
  %v319 = vunpack.c.l.b16 %v300
  %v320 = vpack.c.b16 %v319, %v318
  %v329 = vunpack.c.l.b16 %v301
  %v330 = vunpack.c.l.b16 %v302
  %v331 = vunpack.c.l.b16 %v303
  %v332 = vunpack.c.l.b16 %v304
  %v333 = vunpack.c.l.b16 %v305
  %v334 = vunpack.c.l.b16 %v306
  %v335 = vunpack.c.l.b16 %v307
  %v336 = vunpack.c.l.b16 %v308
  %v337 = vpack.c.b16 %v330, %v329
  %v338 = vpack.c.b16 %v332, %v331
  %v339 = vpack.c.b16 %v334, %v333
  %v340 = vpack.c.b16 %v336, %v335
  %vm345 = vcmask 523264
  %v347 = vsel %vm345, %v320, 0
  %349 = vmatprep.subr.bf16.mxu0 0
  %350 = vmatpush1.bf16.msra.mxu0 0
  %351 = vmatprep.subr.bf16.mxu0 0
  %352 = vmatpush1.bf16.msra.mxu0 0
  %353 = vmatprep.subr.bf16.mxu0 0
  %354 = vmatpush1.bf16.msra.mxu0 0
  %355 = vmatprep.subr.bf16.mxu0 0
  %356 = vmatpush1.bf16.msra.mxu0 0
  %357 = vmatprep.subr.bf16.mxu0 0
  %358 = vmatpush1.bf16.msra.mxu0 %v340
  %359 = vmatprep.subr.bf16.mxu0 0
  %360 = vmatpush1.bf16.msra.mxu0 %v339
  %361 = vmatprep.subr.bf16.mxu0 0
  %362 = vmatpush1.bf16.msra.mxu0 %v338
  %363 = vmatprep.subr.bf16.mxu0 0
  %364 = vmatpush1.bf16.msra.mxu0 %v337
  %365 = vmatprep.subr.bf16.mxu0 0
  %366 = vmatpush2.bf16.msra.mxu0 0
  %367 = vmatprep.subr.bf16.mxu0 0
  %368 = vmatpush2.bf16.msra.mxu0 0
  %369 = vmatprep.subr.bf16.mxu0 0
  %370 = vmatpush2.bf16.msra.mxu0 0
  %371 = vmatprep.subr.bf16.mxu0 0
  %372 = vmatpush2.bf16.msra.mxu0 0
  %373 = vmatprep.subr.bf16.mxu0 0
  %374 = vmatpush2.bf16.msra.mxu0 0
  %375 = vmatprep.subr.bf16.mxu0 0
  %376 = vmatpush2.bf16.msra.mxu0 0
  %377 = vmatprep.subr.bf16.mxu0 0
  %378 = vmatpush2.bf16.msra.mxu0 0
  %379 = vmatprep.subr.bf16.mxu0 0
  %380 = vmatpush2.bf16.msra.mxu0 0
  %381 = vmatprep.mubr.bf16.mxu0 0
  %382 = vmatmul.mubr.bf16.gmra.mxu0 %v347
  %v383 = vpop.f32.mrf.mxu0
  %v384 = vadd.f32 %v314, %v383
  %v385 = vpop.f32.mrf.mxu0
  %v386 = vpop.f32.mrf.mxu0
  %v387 = vadd.f32 %v314, %v386
  %v388 = vpop.f32.mrf.mxu0
  %389 = vdwg.mxu0
  %390 = vst [vmem:[%s9] sm:$0xff] %v384
  %391 = vst [vmem:[%s9 + $0x8] sm:$0xff] %v387
  // Predicated region
  $region42: #{_forward_impl.1} parent=0 // pred_check
    _
  $region43: #{_forward_impl.1} parent=0 // pred_check_branch
    %393 = sbr.rel (0) target = $region45
  $region44: #{_forward_impl.1} parent=0 // pred_region
    _
  $region45: #{_forward_impl.1} parent=0 // pred_fallthru
    _
  // Predicated region
  $region46: #{_forward_impl.1} parent=0 // pred_check
    _
  $region47: #{_forward_impl.1} parent=0 // pred_check_branch
    %395 = sbr.rel (0) target = $region49
  $region48: #{_forward_impl.1} parent=0 // pred_region
    _
  $region49: #{_forward_impl.1} parent=0 // pred_fallthru
    _
  // Predicated region
  $region50: #{_forward_impl.1} parent=0 // pred_check
    _
  $region51: #{_forward_impl.1} parent=0 // pred_check_branch
    %397 = sbr.rel (0) target = $region53
  $region52: #{_forward_impl.1} parent=0 // pred_region
    _
  $region53: #{_forward_impl.1} parent=0 // pred_fallthru
    _
  // Predicated region
  $region54: #{_forward_impl.1} parent=0 // pred_check
    _
  $region55: #{_forward_impl.1} parent=0 // pred_check_branch
    %399 = sbr.rel (0) target = $region57
  $region56: #{_forward_impl.1} parent=0 // pred_region
    _
  $region57: #{_forward_impl.1} parent=0 // pred_fallthru
    _

// kernel: _forward_impl.1
$region0: #{_forward_impl.1}
  #allocation0 [shape = 'u32[]', space=smem, size = 0x4, offset = 0x4, fixed_abs, tag = 'smem constant byte address 0x4 - core index']
  #allocation1 [shape = 'u32[144,128]{1,0:T(1,128)}', space=vmem, size = 0x12000, scoped, tag = 'internal scratch']
  #allocation2 [shape = 'bf16[16,64]{1,0:T(8,128)(2,1)}', space=vmem, size = 0x1000, scoped, tag = 'scratch operand']
  %s0 = inlined_call_operand.vmem [shape: bf16[16,128], index: 0, kind: input, shape index: {}]
  %s1 = inlined_call_operand.vmem [shape: bf16[128,32], index: 1, kind: input, shape index: {}]
  %s2 = inlined_call_operand.vmem [shape: f32[1,32], index: 2, kind: input, shape index: {}]
  %s3 = inlined_call_operand.vmem [shape: bf16[32,64], index: 3, kind: input, shape index: {}]
  %s4 = inlined_call_operand.vmem [shape: f32[1,64], index: 4, kind: input, shape index: {}]
  %s5 = inlined_call_operand.vmem [shape: f32[1,64], index: 5, kind: input, shape index: {}]
  %s6 = inlined_call_operand.vmem [shape: f32[1,64], index: 6, kind: input, shape index: {}]
  %s7 = inlined_call_operand.vmem [shape: bf16[64,128], index: 7, kind: input, shape index: {}]
  %s8 = inlined_call_operand.vmem [shape: f32[1,128], index: 8, kind: input, shape index: {}]
  %s9 = inlined_call_operand.vmem [shape: f32[16,128], index: 9, kind: output, shape index: {0}]
  %s10 = inlined_call_operand.vmem [shape: f32[16,32], index: 10, kind: output, shape index: {1}]
  %11 = xla_tuple %s9, %s10
  %s12 = sld [smem:[#allocation0]]
  $region58: #{_forward_impl.1} parent=0
    _
  %s14 = ssub.s32 1, %s12
  %s15 = scalar_select 0, %s14, %s12
  // Predicated region
  $region2: #{_forward_impl.1} parent=0 // pred_check
    _
  $region3: #{_forward_impl.1} parent=0 // pred_check_branch
    %17 = sbr.rel (0) target = $region5
  $region4: #{_forward_impl.1} parent=0 // pred_region
    _
  $region5: #{_forward_impl.1} parent=0 // pred_fallthru
    _
  // Predicated region
  $region6: #{_forward_impl.1} parent=0 // pred_check
    _
  $region7: #{_forward_impl.1} parent=0 // pred_check_branch
    %19 = sbr.rel (0) target = $region9
  $region8: #{_forward_impl.1} parent=0 // pred_region
    _
  $region9: #{_forward_impl.1} parent=0 // pred_fallthru
    _
  // Predicated region
  $region10: #{_forward_impl.1} parent=0 // pred_check
    _
  $region11: #{_forward_impl.1} parent=0 // pred_check_branch
    %21 = sbr.rel (0) target = $region13
  $region12: #{_forward_impl.1} parent=0 // pred_region
    _
  $region13: #{_forward_impl.1} parent=0 // pred_fallthru
    _
  // Predicated region
  $region14: #{_forward_impl.1} parent=0 // pred_check
    _
  $region15: #{_forward_impl.1} parent=0 // pred_check_branch
    %23 = sbr.rel (0) target = $region17
  $region16: #{_forward_impl.1} parent=0 // pred_region
    _
  $region17: #{_forward_impl.1} parent=0 // pred_fallthru
    _
  // Predicated region
  $region18: #{_forward_impl.1} parent=0 // pred_check
    _
  $region19: #{_forward_impl.1} parent=0 // pred_check_branch
    %25 = sbr.rel (0) target = $region21
  $region20: #{_forward_impl.1} parent=0 // pred_region
    _
  $region21: #{_forward_impl.1} parent=0 // pred_fallthru
    _
  // Predicated region
  $region22: #{_forward_impl.1} parent=0 // pred_check
    _
  $region23: #{_forward_impl.1} parent=0 // pred_check_branch
    %27 = sbr.rel (0) target = $region25
  $region24: #{_forward_impl.1} parent=0 // pred_region
    _
  $region25: #{_forward_impl.1} parent=0 // pred_fallthru
    _
  // Predicated region
  $region26: #{_forward_impl.1} parent=0 // pred_check
    _
  $region27: #{_forward_impl.1} parent=0 // pred_check_branch
    %29 = sbr.rel (0) target = $region29
  $region28: #{_forward_impl.1} parent=0 // pred_region
    _
  $region29: #{_forward_impl.1} parent=0 // pred_fallthru
    _
  // Predicated region
  $region30: #{_forward_impl.1} parent=0 // pred_check
    _
  $region31: #{_forward_impl.1} parent=0 // pred_check_branch
    %31 = sbr.rel (0) target = $region33
  $region32: #{_forward_impl.1} parent=0 // pred_region
    _
  $region33: #{_forward_impl.1} parent=0 // pred_fallthru
    _
  // Predicated region
  $region34: #{_forward_impl.1} parent=0 // pred_check
    _
  $region35: #{_forward_impl.1} parent=0 // pred_check_branch
    %33 = sbr.rel (0) target = $region37
  $region36: #{_forward_impl.1} parent=0 // pred_region
    _
  $region37: #{_forward_impl.1} parent=0 // pred_fallthru
    _
  %p35 = scmp.eq.s32.totalorder 0, 0
  // Predicated region
  $region38: #{_forward_impl.1} parent=0 // pred_check
    %p36 = pneg %p35
  $region39: #{_forward_impl.1} parent=0 // pred_check_branch
    %38 = sbr.rel (%p36) target = $region41
  $region40: #{_forward_impl.1} parent=0 // pred_region
    %v39 = vld [vmem:[%s0] sm:$0xf]
    %v40 = vld [vmem:[%s0 + $0x4] sm:$0xf]
    %v41 = vld [vmem:[%s1] sm:$0xf]
    %v42 = vld [vmem:[%s1 + $0x4] sm:$0xf]
    %v43 = vld [vmem:[%s1 + $0x8] sm:$0xf]
    %v44 = vld [vmem:[%s1 + $0xc] sm:$0xf]
    %v45 = vld [vmem:[%s1 + $0x10] sm:$0xf]
    %v46 = vld [vmem:[%s1 + $0x14] sm:$0xf]
    %v47 = vld [vmem:[%s1 + $0x18] sm:$0xf]
    %v48 = vld [vmem:[%s1 + $0x1c] sm:$0xf]
    %v49 = vld [vmem:[%s1 + $0x20] sm:$0xf]
    %v50 = vld [vmem:[%s1 + $0x24] sm:$0xf]
    %v51 = vld [vmem:[%s1 + $0x28] sm:$0xf]
    %v52 = vld [vmem:[%s1 + $0x2c] sm:$0xf]
    %v53 = vld [vmem:[%s1 + $0x30] sm:$0xf]
    %v54 = vld [vmem:[%s1 + $0x34] sm:$0xf]
    %v55 = vld [vmem:[%s1 + $0x38] sm:$0xf]
    %v56 = vld [vmem:[%s1 + $0x3c] sm:$0xf]
    %v57 = vld [vmem:[%s2] sm:$0x1]
    %v59 = vlaneseq
    %v60 = vshrl.u32 %v59, 7
    %v61 = vsub.s32 0, %v60
    %v62 = vrot.slane %v57, %v61
    %v66 = vunpack.c.l.b16 %v39
    %v67 = vunpack.c.l.b16 %v40
    %v68 = vpack.c.b16 %v67, %v66
    %v86 = vunpack.c.l.b16 %v41
    %v87 = vunpack.c.l.b16 %v42
    %v88 = vunpack.c.l.b16 %v43
    %v89 = vunpack.c.l.b16 %v44
    %v90 = vunpack.c.l.b16 %v45
    %v91 = vunpack.c.l.b16 %v46
    %v92 = vunpack.c.l.b16 %v47
    %v93 = vunpack.c.l.b16 %v48
    %v94 = vunpack.c.l.b16 %v49
    %v95 = vunpack.c.l.b16 %v50
    %v96 = vunpack.c.l.b16 %v51
    %v97 = vunpack.c.l.b16 %v52
    %v98 = vunpack.c.l.b16 %v53
    %v99 = vunpack.c.l.b16 %v54
    %v100 = vunpack.c.l.b16 %v55
    %v101 = vunpack.c.l.b16 %v56
    %v102 = vpack.c.b16 %v87, %v86
    %v103 = vpack.c.b16 %v89, %v88
    %v104 = vpack.c.b16 %v91, %v90
    %v105 = vpack.c.b16 %v93, %v92
    %v106 = vpack.c.b16 %v95, %v94
    %v107 = vpack.c.b16 %v97, %v96
    %v108 = vpack.c.b16 %v99, %v98
    %v109 = vpack.c.b16 %v101, %v100
    %118 = vmatprep.subr.bf16.mxu0 0
    %119 = vmatpush1.bf16.msra.mxu0 %v109
    %120 = vmatprep.subr.bf16.mxu0 0
    %121 = vmatpush1.bf16.msra.mxu0 %v108
    %122 = vmatprep.subr.bf16.mxu0 0
    %123 = vmatpush1.bf16.msra.mxu0 %v107
    %124 = vmatprep.subr.bf16.mxu0 0
    %125 = vmatpush1.bf16.msra.mxu0 %v106
    %126 = vmatprep.subr.bf16.mxu0 0
    %127 = vmatpush1.bf16.msra.mxu0 %v105
    %128 = vmatprep.subr.bf16.mxu0 0
    %129 = vmatpush1.bf16.msra.mxu0 %v104
    %130 = vmatprep.subr.bf16.mxu0 0
    %131 = vmatpush1.bf16.msra.mxu0 %v103
    %132 = vmatprep.subr.bf16.mxu0 0
    %133 = vmatpush1.bf16.msra.mxu0 %v102
    %134 = vmatprep.subr.bf16.mxu0 0
    %135 = vmatpush2.bf16.msra.mxu0 0
    %136 = vmatprep.subr.bf16.mxu0 0
    %137 = vmatpush2.bf16.msra.mxu0 0
    %138 = vmatprep.subr.bf16.mxu0 0
    %139 = vmatpush2.bf16.msra.mxu0 0
    %140 = vmatprep.subr.bf16.mxu0 0
    %141 = vmatpush2.bf16.msra.mxu0 0
    %142 = vmatprep.subr.bf16.mxu0 0
    %143 = vmatpush2.bf16.msra.mxu0 0
    %144 = vmatprep.subr.bf16.mxu0 0
    %145 = vmatpush2.bf16.msra.mxu0 0
    %146 = vmatprep.subr.bf16.mxu0 0
    %147 = vmatpush2.bf16.msra.mxu0 0
    %148 = vmatprep.subr.bf16.mxu0 0
    %149 = vmatpush2.bf16.msra.mxu0 0
    %150 = vmatprep.mubr.bf16.mxu0 0
    %151 = vmatmul.mubr.bf16.gmra.mxu0 %v68
    %v152 = vpop.f32.mrf.mxu0
    %v153 = vadd.f32 %v62, %v152
    %v154 = vpop.f32.mrf.mxu0
    %v155 = vpop.f32.mrf.mxu0
    %v156 = vadd.f32 %v62, %v155
    %v157 = vpop.f32.mrf.mxu0
    %158 = vdwg.mxu0
    %v159 = vtanh.pop %v153
    %v160 = vtanh.pop %v156
    %vm161 = vcmask 261120
    %162 = vst.msk [vmem:[%s10] sm:$0xff] %vm161, %v159
    %163 = vst.msk [vmem:[%s10 + $0x8] sm:$0xff] %vm161, %v160
    %v164 = vpack.c.bf16 %v160, %v159
    %v165 = vld [vmem:[%s3] sm:$0xf]
    %v166 = vld [vmem:[%s3 + $0x4] sm:$0xf]
    %v167 = vld [vmem:[%s3 + $0x8] sm:$0xf]
    %v168 = vld [vmem:[%s3 + $0xc] sm:$0xf]
    %v169 = vld [vmem:[%s4] sm:$0x1]
    %v171 = vlaneseq
    %v172 = vshrl.u32 %v171, 7
    %v173 = vsub.s32 0, %v172
    %v174 = vrot.slane %v169, %v173
    %v180 = vunpack.c.l.b16 %v165
    %v181 = vunpack.c.l.b16 %v166
    %v182 = vunpack.c.l.b16 %v167
    %v183 = vunpack.c.l.b16 %v168
    %v184 = vpack.c.b16 %v181, %v180
    %v185 = vpack.c.b16 %v183, %v182
    %v189 = vsel %vm161, %v164, 0
    %191 = vmatprep.subr.bf16.mxu0 0
    %192 = vmatpush1.bf16.msra.mxu0 0
    %193 = vmatprep.subr.bf16.mxu0 0
    %194 = vmatpush1.bf16.msra.mxu0 0
    %195 = vmatprep.subr.bf16.mxu0 0
    %196 = vmatpush1.bf16.msra.mxu0 0
    %197 = vmatprep.subr.bf16.mxu0 0
    %198 = vmatpush1.bf16.msra.mxu0 0
    %199 = vmatprep.subr.bf16.mxu0 0
    %200 = vmatpush1.bf16.msra.mxu0 0
    %201 = vmatprep.subr.bf16.mxu0 0
    %202 = vmatpush1.bf16.msra.mxu0 0
    %203 = vmatprep.subr.bf16.mxu0 0
    %204 = vmatpush1.bf16.msra.mxu0 %v185
    %205 = vmatprep.subr.bf16.mxu0 0
    %206 = vmatpush1.bf16.msra.mxu0 %v184
    %207 = vmatprep.subr.bf16.mxu0 0
    %208 = vmatpush2.bf16.msra.mxu0 0
    %209 = vmatprep.subr.bf16.mxu0 0
    %210 = vmatpush2.bf16.msra.mxu0 0
    %211 = vmatprep.subr.bf16.mxu0 0
    %212 = vmatpush2.bf16.msra.mxu0 0
    %213 = vmatprep.subr.bf16.mxu0 0
    %214 = vmatpush2.bf16.msra.mxu0 0
    %215 = vmatprep.subr.bf16.mxu0 0
    %216 = vmatpush2.bf16.msra.mxu0 0
    %217 = vmatprep.subr.bf16.mxu0 0
    %218 = vmatpush2.bf16.msra.mxu0 0
    %219 = vmatprep.subr.bf16.mxu0 0
    %220 = vmatpush2.bf16.msra.mxu0 0
    %221 = vmatprep.subr.bf16.mxu0 0
    %222 = vmatpush2.bf16.msra.mxu0 0
    %223 = vmatprep.mubr.bf16.mxu0 0
    %224 = vmatmul.mubr.bf16.gmra.mxu0 %v189
    %v225 = vpop.f32.mrf.mxu0
    %v226 = vadd.f32 %v174, %v225
    %v227 = vpop.f32.mrf.mxu0
    %v228 = vpop.f32.mrf.mxu0
    %v229 = vadd.f32 %v174, %v228
    %v230 = vpop.f32.mrf.mxu0
    %231 = vdwg.mxu0
    %v232 = vmul.f32 %v226, 0.5
    %v233 = vmul.f32 %v229, 0.5
    %v234 = vmul.f32 %v226, 0.70710677
    %v235 = vmul.f32 %v229, 0.70710677
    %v236 = verf.f32.pop %v234
    %v237 = verf.f32.pop %v235
    %v238 = vadd.f32 %v236, 1.0
    %v239 = vadd.f32 %v237, 1.0
    %v240 = vmul.f32 %v232, %v238
    %v241 = vmul.f32 %v233, %v239
    %vm242 = vcmask 523264
    %v243 = vsel %vm242, %v240, 0.0
    %244 = vadd.xlane.f32.xlu0 %v243
    %v245 = vpop.xlane.xlu0 %244
    %v246 = vsel %vm242, %v241, 0.0
    %247 = vadd.xlane.f32.xlu0 %v246
    %v248 = vpop.xlane.xlu0 %247
    %v249 = vrcp.pop 64.0
    %v250 = vmul.f32 %v245, %v249
    %v251 = vmul.f32 %v248, %v249
    %v252 = vsub.f32 %v240, %v250
    %v253 = vsub.f32 %v241, %v251
    %v254 = vmul.f32 %v252, %v252
    %v255 = vmul.f32 %v253, %v253
    %v256 = vsel %vm242, %v254, 0.0
    %257 = vadd.xlane.f32.xlu0 %v256
    %v258 = vpop.xlane.xlu0 %257
    %v259 = vsel %vm242, %v255, 0.0
    %260 = vadd.xlane.f32.xlu0 %v259
    %v261 = vpop.xlane.xlu0 %260
    %v262 = vmul.f32 %v258, %v249
    %v263 = vmul.f32 %v261, %v249
    %v264 = vadd.f32 %v262, 1e-12
    %v265 = vadd.f32 %v263, 1e-12
    %v266 = vrsqrt.pop %v264
    %v267 = vrsqrt.pop %v265
    %v268 = vmul.f32 %v252, %v266
    %v269 = vmul.f32 %v253, %v267
    %v270 = vld [vmem:[%s5] sm:$0x1]
    %v272 = vlaneseq
    %v273 = vshrl.u32 %v272, 7
    %v274 = vsub.s32 0, %v273
    %v275 = vrot.slane %v270, %v274
    %v277 = vmul.f32 %v268, %v275
    %v278 = vmul.f32 %v269, %v275
    %v279 = vld [vmem:[%s6] sm:$0x1]
    %v281 = vlaneseq
    %v282 = vshrl.u32 %v281, 7
    %v283 = vsub.s32 0, %v282
    %v284 = vrot.slane %v279, %v283
    %v286 = vadd.f32 %v277, %v284
    %v287 = vadd.f32 %v278, %v284
    %v288 = vpack.c.bf16 %v287, %v286
    %v290 = vunpack.c.l.b16 %v288
    %v291 = vunpack.c.h.b16 %v288
    %v292 = vpack.c.b16 %v290, %v290
    %v293 = vpack.c.b16 %v291, %v291
    %vm296 = vcmask 519168
    %297 = vst.msk [vmem:[#allocation2] sm:$0xf] %vm296, %v292
    %298 = vst.msk [vmem:[#allocation2 + $0x4] sm:$0xf] %vm296, %v293
  $region41: #{_forward_impl.1} parent=0 // pred_fallthru
    _
  %v299 = vld [vmem:[#allocation2] sm:$0xf]
  %v300 = vld [vmem:[#allocation2 + $0x4] sm:$0xf]
  %v301 = vld [vmem:[%s7] sm:$0xf]
  %v302 = vld [vmem:[%s7 + $0x4] sm:$0xf]
  %v303 = vld [vmem:[%s7 + $0x8] sm:$0xf]
  %v304 = vld [vmem:[%s7 + $0xc] sm:$0xf]
  %v305 = vld [vmem:[%s7 + $0x10] sm:$0xf]
  %v306 = vld [vmem:[%s7 + $0x14] sm:$0xf]
  %v307 = vld [vmem:[%s7 + $0x18] sm:$0xf]
  %v308 = vld [vmem:[%s7 + $0x1c] sm:$0xf]
  %v309 = vld [vmem:[%s8] sm:$0x1]
  %v311 = vlaneseq
  %v312 = vshrl.u32 %v311, 7
  %v313 = vsub.s32 0, %v312
  %v314 = vrot.slane %v309, %v313
  %v318 = vunpack.c.l.b16 %v299
  %v319 = vunpack.c.l.b16 %v300
  %v320 = vpack.c.b16 %v319, %v318
  %v329 = vunpack.c.l.b16 %v301
  %v330 = vunpack.c.l.b16 %v302
  %v331 = vunpack.c.l.b16 %v303
  %v332 = vunpack.c.l.b16 %v304
  %v333 = vunpack.c.l.b16 %v305
  %v334 = vunpack.c.l.b16 %v306
  %v335 = vunpack.c.l.b16 %v307
  %v336 = vunpack.c.l.b16 %v308
  %v337 = vpack.c.b16 %v330, %v329
  %v338 = vpack.c.b16 %v332, %v331
  %v339 = vpack.c.b16 %v334, %v333
  %v340 = vpack.c.b16 %v336, %v335
  %vm345 = vcmask 523264
  %v347 = vsel %vm345, %v320, 0
  %349 = vmatprep.subr.bf16.mxu0 0
  %350 = vmatpush1.bf16.msra.mxu0 0
  %351 = vmatprep.subr.bf16.mxu0 0
  %352 = vmatpush1.bf16.msra.mxu0 0
  %353 = vmatprep.subr.bf16.mxu0 0
  %354 = vmatpush1.bf16.msra.mxu0 0
  %355 = vmatprep.subr.bf16.mxu0 0
  %356 = vmatpush1.bf16.msra.mxu0 0
  %357 = vmatprep.subr.bf16.mxu0 0
  %358 = vmatpush1.bf16.msra.mxu0 %v340
  %359 = vmatprep.subr.bf16.mxu0 0
  %360 = vmatpush1.bf16.msra.mxu0 %v339
  %361 = vmatprep.subr.bf16.mxu0 0
  %362 = vmatpush1.bf16.msra.mxu0 %v338
  %363 = vmatprep.subr.bf16.mxu0 0
  %364 = vmatpush1.bf16.msra.mxu0 %v337
  %365 = vmatprep.subr.bf16.mxu0 0
  %366 = vmatpush2.bf16.msra.mxu0 0
  %367 = vmatprep.subr.bf16.mxu0 0
  %368 = vmatpush2.bf16.msra.mxu0 0
  %369 = vmatprep.subr.bf16.mxu0 0
  %370 = vmatpush2.bf16.msra.mxu0 0
  %371 = vmatprep.subr.bf16.mxu0 0
  %372 = vmatpush2.bf16.msra.mxu0 0
  %373 = vmatprep.subr.bf16.mxu0 0
  %374 = vmatpush2.bf16.msra.mxu0 0
  %375 = vmatprep.subr.bf16.mxu0 0
  %376 = vmatpush2.bf16.msra.mxu0 0
  %377 = vmatprep.subr.bf16.mxu0 0
  %378 = vmatpush2.bf16.msra.mxu0 0
  %379 = vmatprep.subr.bf16.mxu0 0
  %380 = vmatpush2.bf16.msra.mxu0 0
  %381 = vmatprep.mubr.bf16.mxu0 0
  %382 = vmatmul.mubr.bf16.gmra.mxu0 %v347
  %v383 = vpop.f32.mrf.mxu0
  %v384 = vadd.f32 %v314, %v383
  %v385 = vpop.f32.mrf.mxu0
  %v386 = vpop.f32.mrf.mxu0
  %v387 = vadd.f32 %v314, %v386
  %v388 = vpop.f32.mrf.mxu0
  %389 = vdwg.mxu0
  %390 = vst [vmem:[%s9] sm:$0xff] %v384
  %391 = vst [vmem:[%s9 + $0x8] sm:$0xff] %v387
  // Predicated region
  $region42: #{_forward_impl.1} parent=0 // pred_check
    _
  $region43: #{_forward_impl.1} parent=0 // pred_check_branch
    %393 = sbr.rel (0) target = $region45
  $region44: #{_forward_impl.1} parent=0 // pred_region
    _
  $region45: #{_forward_impl.1} parent=0 // pred_fallthru
    _
  // Predicated region
  $region46: #{_forward_impl.1} parent=0 // pred_check
    _
  $region47: #{_forward_impl.1} parent=0 // pred_check_branch
    %395 = sbr.rel (0) target = $region49
  $region48: #{_forward_impl.1} parent=0 // pred_region
    _
  $region49: #{_forward_impl.1} parent=0 // pred_fallthru
    _
  // Predicated region
  $region50: #{_forward_impl.1} parent=0 // pred_check
    _
  $region51: #{_forward_impl.1} parent=0 // pred_check_branch
    %397 = sbr.rel (0) target = $region53
  $region52: #{_forward_impl.1} parent=0 // pred_region
    _
  $region53: #{_forward_impl.1} parent=0 // pred_fallthru
    _
  // Predicated region
  $region54: #{_forward_impl.1} parent=0 // pred_check
    _
  $region55: #{_forward_impl.1} parent=0 // pred_check_branch
    %399 = sbr.rel (0) target = $region57
  $region56: #{_forward_impl.1} parent=0 // pred_region
    _
  $region57: #{_forward_impl.1} parent=0 // pred_fallthru
    _

</llo_original>
